<compile_context>
chip_gen: v5e
topology: v5e:2x2
jax: 0.10.0
libtpu: 0.0.40
codegen_flags: <defaults>
</compile_context>

<pallas_src>
import math
from functools import partial

import jax
import jax.numpy as jnp
from jax import lax
from jax.experimental import pallas as pl
from jax.experimental.pallas import tpu as pltpu

STD_MIN = 1e-5
STD_MAX = 5.0
LOG_STD_MIN = math.log(STD_MIN)
LOG_STD_MAX = math.log(STD_MAX)
LOG_2PI = math.log(2.0 * math.pi)

LANE = 128  # TPU lane width


def _cdiv(a, b):
    return (a + b - 1) // b


def _ru(x, m):
    return _cdiv(x, m) * m


def _pad2(x, rows, cols):
    return jnp.pad(x, ((0, rows - x.shape[0]), (0, cols - x.shape[1])))


def _make_actor_kernel(action_dim):
    """Builds the kernel body; `action_dim` (the real, un-padded A) is closed over."""

    def kernel(obs_ref, eps_ref, mask_ref,
               w1_ref, b1_ref, w2_ref, b2_ref, w3_ref, b3_ref,
               wh_ref, bh_ref,
               action_ref, logp_ref, mean_ref):
        f32 = jnp.float32
        bf16 = jnp.bfloat16

        # policy_net = MLP(..., activate_final=True): 3x (Linear + ReLU).
        # bf16 MXU operands, f32 accumulation, f32 bias/activation.
        x = obs_ref[...].astype(bf16)
        h = jnp.maximum(
            jnp.dot(x, w1_ref[...], preferred_element_type=f32) + b1_ref[...], 0.0)
        h = jnp.maximum(
            jnp.dot(h.astype(bf16), w2_ref[...], preferred_element_type=f32) + b2_ref[...], 0.0)
        h = jnp.maximum(
            jnp.dot(h.astype(bf16), w3_ref[...], preferred_element_type=f32) + b3_ref[...], 0.0)

        # Fused mean / log_std head: one [H_pad, 2*A_pad] matmul, kept in f32
        # (mean / log_std feed the numerically sensitive log-prob tail).
        y = jnp.dot(h, wh_ref[...], preferred_element_type=f32) + bh_ref[...]
        a_pad = action_ref.shape[-1]
        mean = y[:, :a_pad]
        log_std = jnp.clip(y[:, a_pad:], LOG_STD_MIN, LOG_STD_MAX)
        std = jnp.exp(log_std)

        # rsample: x_t = mean + std * eps  (eps ~ N(0,1), zero in padded lanes)
        eps = eps_ref[...]
        x_t = mean + std * eps
        action = jnp.tanh(x_t)
        mean_t = jnp.tanh(mean)

        # Precomputed resident validity mask (1.0 on real action lanes).
        mask = mask_ref[...]

        # Squashed-Gaussian log-prob, folded into ONE lane reduction:
        #   logp = sum_lanes( -0.5*eps^2 - mask*(log_std + log(1 - a^2 + 1e-6)) )
        #          - 0.5*A*log(2*pi)
        # (padded eps lanes are exactly 0, so the eps^2 term needs no mask).
        per_lane = -0.5 * (eps * eps) - (log_std + jnp.log(1.0 - action * action + 1e-6)) * mask
        logp = jnp.sum(per_lane, axis=-1, keepdims=True) - 0.5 * action_dim * LOG_2PI

        # Lane-dense stores (A_pad / 128-wide slabs); wrapper slices back.
        action_ref[...] = action
        mean_ref[...] = mean_t
        logp_ref[...] = jnp.broadcast_to(logp, logp_ref.shape)

    return kernel


def actor_forward(obs, eps, params, action_dim, single_buffer_weights=True):
    """obs: [B, D_in] f32, eps: [B, A] f32 standard-normal noise.

    Returns (action [B, A], log_prob [B, 1], tanh(mean) [B, A]).
    """
    B, D_in = obs.shape
    A = action_dim
    H1 = params["w1"].shape[1]
    H2 = params["w2"].shape[1]
    H3 = params["w3"].shape[1]

    # Pad feature dims to lane width.
    D_p = _ru(D_in, LANE)
    H1_p = _ru(H1, LANE)
    H2_p = _ru(H2, LANE)
    H3_p = _ru(H3, LANE)
    A_p = _ru(A, LANE)

    # Batch tile: minimize padding subject to a 512-row cap, and for large B
    # cap at cdiv(B, 2) so the parallel grid has >= 2 steps (v7x megacore).
    TB_MAX = 512
    TB = _ru(_cdiv(B, _cdiv(B, TB_MAX)), 8)
    if B > 16:
        TB = min(TB, _ru(_cdiv(B, 2), 8))
    TB = max(TB, 8)
    B_p = _ru(B, TB)

    # Zero-pad weights; hidden-layer matmul operands in bf16, head weight f32.
    w1 = _pad2(params["w1"], D_p, H1_p).astype(jnp.bfloat16)
    w2 = _pad2(params["w2"], H1_p, H2_p).astype(jnp.bfloat16)
    w3 = _pad2(params["w3"], H2_p, H3_p).astype(jnp.bfloat16)
    b1 = _pad2(params["b1"], 1, H1_p)
    b2 = _pad2(params["b2"], 1, H2_p)
    b3 = _pad2(params["b3"], 1, H3_p)
    # Fused head weight [H3_p, 2*A_p]: cols [0:A] = mean head, cols [A_p:A_p+A] = log_std head.
    wh = jnp.concatenate([_pad2(params["wm"], H3_p, A_p),
                          _pad2(params["ws"], H3_p, A_p)], axis=1)
    bh = jnp.concatenate([_pad2(params["bm"], 1, A_p),
                          _pad2(params["bs"], 1, A_p)], axis=1)
    mask = (jnp.arange(A_p) < A).astype(jnp.float32).reshape(1, A_p)

    obs_p = _pad2(obs, B_p, D_p)
    eps_p = _pad2(eps, B_p, A_p)

    args = (obs_p, eps_p, mask, w1, b1, w2, b2, w3, b3, wh, bh)

    def batch_spec(cols):
        return pl.BlockSpec((TB, cols), lambda i: (i, 0))

    if single_buffer_weights:
        def resident(shape):
            # Same block every grid step -> keep a single VMEM copy (no double buffer).
            return pl.BlockSpec(shape, lambda i: (0, 0), pipeline_mode=pl.Buffered(1))
    else:
        def resident(shape):
            return pl.BlockSpec(shape, lambda i: (0, 0))

    in_specs = [
        batch_spec(D_p),            # obs
        batch_spec(A_p),            # eps
        resident((1, A_p)),         # valid-lane mask
        resident((D_p, H1_p)), resident((1, H1_p)),
        resident((H1_p, H2_p)), resident((1, H2_p)),
        resident((H2_p, H3_p)), resident((1, H3_p)),
        resident((H3_p, 2 * A_p)), resident((1, 2 * A_p)),
    ]
    out_specs = (
        batch_spec(A_p),            # action
        batch_spec(LANE),           # log_prob (lane-dense slab, sliced to 1 in wrapper)
        batch_spec(A_p),            # tanh(mean)
    )
    out_shape = (
        jax.ShapeDtypeStruct((B_p, A_p), jnp.float32),
        jax.ShapeDtypeStruct((B_p, LANE), jnp.float32),
        jax.ShapeDtypeStruct((B_p, A_p), jnp.float32),
    )

    # VMEM budget: resident weights (1 or 2 buffers) + double-buffered batch tiles.
    nbuf_w = 1 if single_buffer_weights else 2
    weight_bytes = int(w1.size) * 2 + int(w2.size) * 2 + int(w3.size) * 2 + int(wh.size) * 4
    bias_bytes = (int(b1.size) + int(b2.size) + int(b3.size) + int(bh.size) + int(mask.size)) * 4
    tile_bytes = 2 * TB * (D_p + 3 * A_p + LANE) * 4
    vmem_need = nbuf_w * (weight_bytes + bias_bytes) + tile_bytes
    vmem_limit = int(min(64 << 20, max(16 << 20, int(vmem_need * 1.5) + (2 << 20))))

    flops = 2 * B_p * (D_p * H1_p + H1_p * H2_p + H2_p * H3_p + H3_p * 2 * A_p)
    transcendentals = 4 * B_p * A_p  # exp + 2*tanh + log per action lane
    bytes_accessed = (
        (obs_p.size + eps_p.size) * 4
        + weight_bytes + bias_bytes
        + (2 * B_p * A_p + B_p * LANE) * 4
    )

    action_p, logp_p, mean_p = pl.pallas_call(
        _make_actor_kernel(A),
        grid=(B_p // TB,),
        in_specs=in_specs,
        out_specs=out_specs,
        out_shape=out_shape,
        compiler_params=pltpu.CompilerParams(
            dimension_semantics=("parallel",),
            vmem_limit_bytes=vmem_limit),
        cost_estimate=pl.CostEstimate(
            flops=int(flops),
            transcendentals=int(transcendentals),
            bytes_accessed=int(bytes_accessed)),
    )(*args)

    return action_p[:B, :A], logp_p[:B, :1], mean_p[:B, :A]


def actor_reference(obs, eps, params):
    """Pure-JAX f32 reference mirroring the PyTorch forward."""
    h = jnp.maximum(obs @ params["w1"] + params["b1"], 0.0)
    h = jnp.maximum(h @ params["w2"] + params["b2"], 0.0)
    h = jnp.maximum(h @ params["w3"] + params["b3"], 0.0)
    mean = h @ params["wm"] + params["bm"]
    log_std = jnp.clip(h @ params["ws"] + params["bs"], LOG_STD_MIN, LOG_STD_MAX)
    std = jnp.exp(log_std)
    x_t = mean + std * eps
    action = jnp.tanh(x_t)
    logp = jnp.sum(-0.5 * eps * eps - log_std - 0.5 * LOG_2PI, axis=-1, keepdims=True)
    logp = logp - jnp.sum(jnp.log(1.0 - action * action + 1e-6), axis=-1, keepdims=True)
    return action, logp, jnp.tanh(mean)


def _linear_init(key, fan_in, fan_out):
    # PyTorch nn.Linear default: U(-1/sqrt(fan_in), 1/sqrt(fan_in))
    kw, kb = jax.random.split(key)
    bound = 1.0 / math.sqrt(fan_in)
    w = jax.random.uniform(kw, (fan_in, fan_out), jnp.float32, -bound, bound)
    b = jax.random.uniform(kb, (1, fan_out), jnp.float32, -bound, bound)
    return w, b


def make_params(key, input_dim, hidden_dims, action_dim):
    # policy_net = MLP: input_dim -> hidden_dims[0] -> hidden_dims[1] -> hidden_dims[-1]
    k1, k2, k3, km, ks = jax.random.split(key, 5)
    w1, b1 = _linear_init(k1, input_dim, hidden_dims[0])
    w2, b2 = _linear_init(k2, hidden_dims[0], hidden_dims[1])
    w3, b3 = _linear_init(k3, hidden_dims[1], hidden_dims[-1])
    wm, bm = _linear_init(km, hidden_dims[-1], action_dim)
    ws, bs = _linear_init(ks, hidden_dims[-1], action_dim)
    return dict(w1=w1, b1=b1, w2=w2, b2=b2, w3=w3, b3=b3,
                wm=wm, bm=bm, ws=ws, bs=bs)


if __name__ == "__main__":
    key = jax.random.PRNGKey(0)
    k_obs, k_eps, k_par = jax.random.split(key, 3)

    B = 8           # batch
    INPUT_DIM = 32  # state-feature dim (encoder=None, input_dim=32)
    HIDDEN = (32, 32)
    ACTION_DIM = 8

    obs = jax.random.normal(k_obs, (B, INPUT_DIM), jnp.float32)
    eps = jax.random.normal(k_eps, (B, ACTION_DIM), jnp.float32)  # rsample noise
    params = make_params(k_par, INPUT_DIM, HIDDEN, ACTION_DIM)

    action = log_prob = mean = None
    # Prefer single-buffered resident weights; fall back to default pipelining
    # if this jax version rejects a 1-deep pipeline_mode.
    for single_buffer in (True, False):
        try:
            fwd = jax.jit(partial(actor_forward, action_dim=ACTION_DIM,
                                  single_buffer_weights=single_buffer))
            action, log_prob, mean = fwd(obs, eps, params)
            jax.block_until_ready((action, log_prob, mean))
            break
        except Exception:
            if not single_buffer:
                raise

    assert action.shape == (B, ACTION_DIM)
    assert log_prob.shape == (B, 1)
    assert mean.shape == (B, ACTION_DIM)
    assert bool(jnp.all(jnp.isfinite(action)))
    assert bool(jnp.all(jnp.isfinite(log_prob)))
    assert bool(jnp.all(jnp.isfinite(mean)))

    # Loose parity check against a pure-f32 reference (hidden layers use bf16 MXU operands).
    a_ref, lp_ref, m_ref = actor_reference(obs, eps, params)
    assert float(jnp.max(jnp.abs(action - a_ref))) < 0.1
    assert float(jnp.max(jnp.abs(mean - m_ref))) < 0.1
    assert float(jnp.max(jnp.abs(log_prob - lp_ref))) < 0.5

    print("KERNEL_OK")
</pallas_src>

<mosaic_0001>
module attributes {stable_mosaic.version = 11 : i64} {
  func.func @kernel(%arg0: i32, %arg1: memref<8x128xf32, #tpu.memory_space<vmem>>, %arg2: memref<8x128xf32, #tpu.memory_space<vmem>>, %arg3: memref<1x128xf32, #tpu.memory_space<vmem>>, %arg4: memref<128x128xbf16, #tpu.memory_space<vmem>>, %arg5: memref<1x128xf32, #tpu.memory_space<vmem>>, %arg6: memref<128x128xbf16, #tpu.memory_space<vmem>>, %arg7: memref<1x128xf32, #tpu.memory_space<vmem>>, %arg8: memref<128x128xbf16, #tpu.memory_space<vmem>>, %arg9: memref<1x128xf32, #tpu.memory_space<vmem>>, %arg10: memref<128x256xf32, #tpu.memory_space<vmem>>, %arg11: memref<1x256xf32, #tpu.memory_space<vmem>>, %arg12: memref<8x128xf32, #tpu.memory_space<vmem>>, %arg13: memref<8x128xf32, #tpu.memory_space<vmem>>, %arg14: memref<8x128xf32, #tpu.memory_space<vmem>>) attributes {dimension_semantics = [#tpu.dimension_semantics<parallel>], iteration_bounds = array<i64: 1>, scalar_prefetch = 0 : i64, scratch_operands = 0 : i64, tpu.core_type = #tpu.core_type<tc>, window_params = [{transform_indices = @transform_0, window_bounds = array<i64: 8, 128>}, {transform_indices = @transform_1, window_bounds = array<i64: 8, 128>}, {pipeline_mode = #tpu.pipeline_mode<synchronous>, transform_indices = @transform_2, window_bounds = array<i64: 1, 128>}, {pipeline_mode = #tpu.pipeline_mode<synchronous>, transform_indices = @transform_3, window_bounds = array<i64: 128, 128>}, {pipeline_mode = #tpu.pipeline_mode<synchronous>, transform_indices = @transform_4, window_bounds = array<i64: 1, 128>}, {pipeline_mode = #tpu.pipeline_mode<synchronous>, transform_indices = @transform_5, window_bounds = array<i64: 128, 128>}, {pipeline_mode = #tpu.pipeline_mode<synchronous>, transform_indices = @transform_6, window_bounds = array<i64: 1, 128>}, {pipeline_mode = #tpu.pipeline_mode<synchronous>, transform_indices = @transform_7, window_bounds = array<i64: 128, 128>}, {pipeline_mode = #tpu.pipeline_mode<synchronous>, transform_indices = @transform_8, window_bounds = array<i64: 1, 128>}, {pipeline_mode = #tpu.pipeline_mode<synchronous>, transform_indices = @transform_9, window_bounds = array<i64: 128, 256>}, {pipeline_mode = #tpu.pipeline_mode<synchronous>, transform_indices = @transform_10, window_bounds = array<i64: 1, 256>}, {transform_indices = @transform_11, window_bounds = array<i64: 8, 128>}, {transform_indices = @transform_12, window_bounds = array<i64: 8, 128>}, {transform_indices = @transform_13, window_bounds = array<i64: 8, 128>}]} {
    %c0 = arith.constant 0 : index
    %c0_0 = arith.constant 0 : index
    %0 = vector.load %arg1[%c0, %c0_0] : memref<8x128xf32, #tpu.memory_space<vmem>>, vector<8x128xf32>
    %1 = arith.truncf %0 : vector<8x128xf32> to vector<8x128xbf16>
    %c0_1 = arith.constant 0 : index
    %c0_2 = arith.constant 0 : index
    %2 = vector.load %arg4[%c0_1, %c0_2] : memref<128x128xbf16, #tpu.memory_space<vmem>>, vector<128x128xbf16>
    %cst = arith.constant dense<0.000000e+00> : vector<8x128xf32>
    %3 = tpu.matmul %1, %2, %cst {dimension_numbers = #tpu.dot_dimension_numbers<[1], [0], [0], [1], [0, 0, 1, 1], [], []>} : vector<8x128xbf16>, vector<128x128xbf16>, vector<8x128xf32> -> vector<8x128xf32>
    %c0_3 = arith.constant 0 : index
    %c0_4 = arith.constant 0 : index
    %4 = vector.load %arg5[%c0_3, %c0_4] : memref<1x128xf32, #tpu.memory_space<vmem>>, vector<1x128xf32>
    %5 = vector.broadcast %4 : vector<1x128xf32> to vector<8x128xf32>
    %6 = arith.addf %3, %5 : vector<8x128xf32>
    %cst_5 = arith.constant 0.000000e+00 : f32
    %7 = vector.broadcast %cst_5 : f32 to vector<8x128xf32>
    %8 = arith.maximumf %6, %7 : vector<8x128xf32>
    %9 = arith.truncf %8 : vector<8x128xf32> to vector<8x128xbf16>
    %c0_6 = arith.constant 0 : index
    %c0_7 = arith.constant 0 : index
    %10 = vector.load %arg6[%c0_6, %c0_7] : memref<128x128xbf16, #tpu.memory_space<vmem>>, vector<128x128xbf16>
    %cst_8 = arith.constant dense<0.000000e+00> : vector<8x128xf32>
    %11 = tpu.matmul %9, %10, %cst_8 {dimension_numbers = #tpu.dot_dimension_numbers<[1], [0], [0], [1], [0, 0, 1, 1], [], []>} : vector<8x128xbf16>, vector<128x128xbf16>, vector<8x128xf32> -> vector<8x128xf32>
    %c0_9 = arith.constant 0 : index
    %c0_10 = arith.constant 0 : index
    %12 = vector.load %arg7[%c0_9, %c0_10] : memref<1x128xf32, #tpu.memory_space<vmem>>, vector<1x128xf32>
    %13 = vector.broadcast %12 : vector<1x128xf32> to vector<8x128xf32>
    %14 = arith.addf %11, %13 : vector<8x128xf32>
    %cst_11 = arith.constant 0.000000e+00 : f32
    %15 = vector.broadcast %cst_11 : f32 to vector<8x128xf32>
    %16 = arith.maximumf %14, %15 : vector<8x128xf32>
    %17 = arith.truncf %16 : vector<8x128xf32> to vector<8x128xbf16>
    %c0_12 = arith.constant 0 : index
    %c0_13 = arith.constant 0 : index
    %18 = vector.load %arg8[%c0_12, %c0_13] : memref<128x128xbf16, #tpu.memory_space<vmem>>, vector<128x128xbf16>
    %cst_14 = arith.constant dense<0.000000e+00> : vector<8x128xf32>
    %19 = tpu.matmul %17, %18, %cst_14 {dimension_numbers = #tpu.dot_dimension_numbers<[1], [0], [0], [1], [0, 0, 1, 1], [], []>} : vector<8x128xbf16>, vector<128x128xbf16>, vector<8x128xf32> -> vector<8x128xf32>
    %c0_15 = arith.constant 0 : index
    %c0_16 = arith.constant 0 : index
    %20 = vector.load %arg9[%c0_15, %c0_16] : memref<1x128xf32, #tpu.memory_space<vmem>>, vector<1x128xf32>
    %21 = vector.broadcast %20 : vector<1x128xf32> to vector<8x128xf32>
    %22 = arith.addf %19, %21 : vector<8x128xf32>
    %cst_17 = arith.constant 0.000000e+00 : f32
    %23 = vector.broadcast %cst_17 : f32 to vector<8x128xf32>
    %24 = arith.maximumf %22, %23 : vector<8x128xf32>
    %c0_18 = arith.constant 0 : index
    %c0_19 = arith.constant 0 : index
    %25 = vector.load %arg10[%c0_18, %c0_19] : memref<128x256xf32, #tpu.memory_space<vmem>>, vector<128x256xf32>
    %cst_20 = arith.constant dense<0.000000e+00> : vector<8x256xf32>
    %26 = tpu.matmul %24, %25, %cst_20 {dimension_numbers = #tpu.dot_dimension_numbers<[1], [0], [0], [1], [0, 0, 1, 1], [], []>} : vector<8x128xf32>, vector<128x256xf32>, vector<8x256xf32> -> vector<8x256xf32>
    %c0_21 = arith.constant 0 : index
    %c0_22 = arith.constant 0 : index
    %27 = vector.load %arg11[%c0_21, %c0_22] : memref<1x256xf32, #tpu.memory_space<vmem>>, vector<1x256xf32>
    %28 = vector.broadcast %27 : vector<1x256xf32> to vector<8x256xf32>
    %29 = arith.addf %26, %28 : vector<8x256xf32>
    %30 = vector.extract_strided_slice %29 {offsets = [0, 0], sizes = [8, 128], strides = [1, 1]} : vector<8x256xf32> to vector<8x128xf32>
    %31 = vector.extract_strided_slice %29 {offsets = [0, 128], sizes = [8, 128], strides = [1, 1]} : vector<8x256xf32> to vector<8x128xf32>
    %cst_23 = arith.constant -11.5129251 : f32
    %cst_24 = arith.constant 1.60943794 : f32
    %32 = vector.broadcast %cst_23 : f32 to vector<8x128xf32>
    %33 = arith.maximumf %32, %31 : vector<8x128xf32>
    %34 = vector.broadcast %cst_24 : f32 to vector<8x128xf32>
    %35 = arith.minimumf %34, %33 : vector<8x128xf32>
    %36 = math.exp %35 : vector<8x128xf32>
    %c0_25 = arith.constant 0 : index
    %c0_26 = arith.constant 0 : index
    %37 = vector.load %arg2[%c0_25, %c0_26] : memref<8x128xf32, #tpu.memory_space<vmem>>, vector<8x128xf32>
    %38 = arith.mulf %36, %37 : vector<8x128xf32>
    %39 = arith.addf %30, %38 : vector<8x128xf32>
    %40 = math.tanh %39 : vector<8x128xf32>
    %41 = math.tanh %30 : vector<8x128xf32>
    %c0_27 = arith.constant 0 : index
    %c0_28 = arith.constant 0 : index
    %42 = vector.load %arg3[%c0_27, %c0_28] : memref<1x128xf32, #tpu.memory_space<vmem>>, vector<1x128xf32>
    %43 = arith.mulf %37, %37 : vector<8x128xf32>
    %cst_29 = arith.constant -5.000000e-01 : f32
    %44 = vector.broadcast %cst_29 : f32 to vector<8x128xf32>
    %45 = arith.mulf %44, %43 : vector<8x128xf32>
    %46 = arith.mulf %40, %40 : vector<8x128xf32>
    %cst_30 = arith.constant 1.000000e+00 : f32
    %47 = vector.broadcast %cst_30 : f32 to vector<8x128xf32>
    %48 = arith.subf %47, %46 : vector<8x128xf32>
    %cst_31 = arith.constant 9.99999997E-7 : f32
    %49 = vector.broadcast %cst_31 : f32 to vector<8x128xf32>
    %50 = arith.addf %48, %49 : vector<8x128xf32>
    %51 = math.log %50 : vector<8x128xf32>
    %52 = arith.addf %35, %51 : vector<8x128xf32>
    %53 = vector.broadcast %42 : vector<1x128xf32> to vector<8x128xf32>
    %54 = arith.mulf %52, %53 : vector<8x128xf32>
    %55 = arith.subf %45, %54 : vector<8x128xf32>
    %cst_32 = arith.constant dense<0.000000e+00> : vector<8xf32>
    %56 = vector.multi_reduction <add>, %55, %cst_32 [1] : vector<8x128xf32> to vector<8xf32>
    %57 = vector.shape_cast %56 : vector<8xf32> to vector<8x1xf32>
    %cst_33 = arith.constant 7.35150814 : f32
    %58 = vector.broadcast %cst_33 : f32 to vector<8x1xf32>
    %59 = arith.subf %57, %58 : vector<8x1xf32>
    %c0_34 = arith.constant 0 : index
    %c0_35 = arith.constant 0 : index
    %60 = vector.load %arg12[%c0_34, %c0_35] : memref<8x128xf32, #tpu.memory_space<vmem>>, vector<8x128xf32>
    tpu.vector_store %arg12[%c0_34, %c0_35], %40 {strides = array<i32>} : memref<8x128xf32, #tpu.memory_space<vmem>>, vector<8x128xf32>,
    %c0_36 = arith.constant 0 : index
    %c0_37 = arith.constant 0 : index
    %61 = vector.load %arg14[%c0_36, %c0_37] : memref<8x128xf32, #tpu.memory_space<vmem>>, vector<8x128xf32>
    tpu.vector_store %arg14[%c0_36, %c0_37], %41 {strides = array<i32>} : memref<8x128xf32, #tpu.memory_space<vmem>>, vector<8x128xf32>,
    %62 = vector.shape_cast %59 : vector<8x1xf32> to vector<8x1xf32>
    %63 = vector.broadcast %62 : vector<8x1xf32> to vector<8x128xf32>
    %c0_38 = arith.constant 0 : index
    %c0_39 = arith.constant 0 : index
    %64 = vector.load %arg13[%c0_38, %c0_39] : memref<8x128xf32, #tpu.memory_space<vmem>>, vector<8x128xf32>
    tpu.vector_store %arg13[%c0_38, %c0_39], %63 {strides = array<i32>} : memref<8x128xf32, #tpu.memory_space<vmem>>, vector<8x128xf32>,
    return
  }
  func.func @transform_0(%arg0: i32) -> (i32, i32) {
    %c0_i32 = arith.constant 0 : i32
    %c0_i32_0 = arith.constant 0 : i32
    return %arg0, %c0_i32 : i32, i32
  }
  func.func @transform_1(%arg0: i32) -> (i32, i32) {
    %c0_i32 = arith.constant 0 : i32
    %c0_i32_0 = arith.constant 0 : i32
    return %arg0, %c0_i32 : i32, i32
  }
  func.func @transform_2(%arg0: i32) -> (i32, i32) {
    %c0_i32 = arith.constant 0 : i32
    %c0_i32_0 = arith.constant 0 : i32
    %c0_i32_1 = arith.constant 0 : i32
    return %c0_i32, %c0_i32_0 : i32, i32
  }
  func.func @transform_3(%arg0: i32) -> (i32, i32) {
    %c0_i32 = arith.constant 0 : i32
    %c0_i32_0 = arith.constant 0 : i32
    %c0_i32_1 = arith.constant 0 : i32
    return %c0_i32, %c0_i32_0 : i32, i32
  }
  func.func @transform_4(%arg0: i32) -> (i32, i32) {
    %c0_i32 = arith.constant 0 : i32
    %c0_i32_0 = arith.constant 0 : i32
    %c0_i32_1 = arith.constant 0 : i32
    return %c0_i32, %c0_i32_0 : i32, i32
  }
  func.func @transform_5(%arg0: i32) -> (i32, i32) {
    %c0_i32 = arith.constant 0 : i32
    %c0_i32_0 = arith.constant 0 : i32
    %c0_i32_1 = arith.constant 0 : i32
    return %c0_i32, %c0_i32_0 : i32, i32
  }
  func.func @transform_6(%arg0: i32) -> (i32, i32) {
    %c0_i32 = arith.constant 0 : i32
    %c0_i32_0 = arith.constant 0 : i32
    %c0_i32_1 = arith.constant 0 : i32
    return %c0_i32, %c0_i32_0 : i32, i32
  }
  func.func @transform_7(%arg0: i32) -> (i32, i32) {
    %c0_i32 = arith.constant 0 : i32
    %c0_i32_0 = arith.constant 0 : i32
    %c0_i32_1 = arith.constant 0 : i32
    return %c0_i32, %c0_i32_0 : i32, i32
  }
  func.func @transform_8(%arg0: i32) -> (i32, i32) {
    %c0_i32 = arith.constant 0 : i32
    %c0_i32_0 = arith.constant 0 : i32
    %c0_i32_1 = arith.constant 0 : i32
    return %c0_i32, %c0_i32_0 : i32, i32
  }
  func.func @transform_9(%arg0: i32) -> (i32, i32) {
    %c0_i32 = arith.constant 0 : i32
    %c0_i32_0 = arith.constant 0 : i32
    %c0_i32_1 = arith.constant 0 : i32
    return %c0_i32, %c0_i32_0 : i32, i32
  }
  func.func @transform_10(%arg0: i32) -> (i32, i32) {
    %c0_i32 = arith.constant 0 : i32
    %c0_i32_0 = arith.constant 0 : i32
    %c0_i32_1 = arith.constant 0 : i32
    return %c0_i32, %c0_i32_0 : i32, i32
  }
  func.func @transform_11(%arg0: i32) -> (i32, i32) {
    %c0_i32 = arith.constant 0 : i32
    %c0_i32_0 = arith.constant 0 : i32
    return %arg0, %c0_i32 : i32, i32
  }
  func.func @transform_12(%arg0: i32) -> (i32, i32) {
    %c0_i32 = arith.constant 0 : i32
    %c0_i32_0 = arith.constant 0 : i32
    return %arg0, %c0_i32 : i32, i32
  }
  func.func @transform_13(%arg0: i32) -> (i32, i32) {
    %c0_i32 = arith.constant 0 : i32
    %c0_i32_0 = arith.constant 0 : i32
    return %arg0, %c0_i32 : i32, i32
  }
}

module attributes {stable_mosaic.version = 11 : i64} {
  func.func @kernel(%arg0: i32, %arg1: memref<8x128xf32, #tpu.memory_space<vmem>>, %arg2: memref<8x128xf32, #tpu.memory_space<vmem>>, %arg3: memref<1x128xf32, #tpu.memory_space<vmem>>, %arg4: memref<128x128xbf16, #tpu.memory_space<vmem>>, %arg5: memref<1x128xf32, #tpu.memory_space<vmem>>, %arg6: memref<128x128xbf16, #tpu.memory_space<vmem>>, %arg7: memref<1x128xf32, #tpu.memory_space<vmem>>, %arg8: memref<128x128xbf16, #tpu.memory_space<vmem>>, %arg9: memref<1x128xf32, #tpu.memory_space<vmem>>, %arg10: memref<128x256xf32, #tpu.memory_space<vmem>>, %arg11: memref<1x256xf32, #tpu.memory_space<vmem>>, %arg12: memref<8x128xf32, #tpu.memory_space<vmem>>, %arg13: memref<8x128xf32, #tpu.memory_space<vmem>>, %arg14: memref<8x128xf32, #tpu.memory_space<vmem>>) attributes {dimension_semantics = [#tpu.dimension_semantics<parallel>], iteration_bounds = array<i64: 1>, scalar_prefetch = 0 : i64, scratch_operands = 0 : i64, tpu.core_type = #tpu.core_type<tc>, window_params = [{transform_indices = @transform_0, window_bounds = array<i64: 8, 128>}, {transform_indices = @transform_1, window_bounds = array<i64: 8, 128>}, {pipeline_mode = #tpu.pipeline_mode<synchronous>, transform_indices = @transform_2, window_bounds = array<i64: 1, 128>}, {pipeline_mode = #tpu.pipeline_mode<synchronous>, transform_indices = @transform_3, window_bounds = array<i64: 128, 128>}, {pipeline_mode = #tpu.pipeline_mode<synchronous>, transform_indices = @transform_4, window_bounds = array<i64: 1, 128>}, {pipeline_mode = #tpu.pipeline_mode<synchronous>, transform_indices = @transform_5, window_bounds = array<i64: 128, 128>}, {pipeline_mode = #tpu.pipeline_mode<synchronous>, transform_indices = @transform_6, window_bounds = array<i64: 1, 128>}, {pipeline_mode = #tpu.pipeline_mode<synchronous>, transform_indices = @transform_7, window_bounds = array<i64: 128, 128>}, {pipeline_mode = #tpu.pipeline_mode<synchronous>, transform_indices = @transform_8, window_bounds = array<i64: 1, 128>}, {pipeline_mode = #tpu.pipeline_mode<synchronous>, transform_indices = @transform_9, window_bounds = array<i64: 128, 256>}, {pipeline_mode = #tpu.pipeline_mode<synchronous>, transform_indices = @transform_10, window_bounds = array<i64: 1, 256>}, {transform_indices = @transform_11, window_bounds = array<i64: 8, 128>}, {transform_indices = @transform_12, window_bounds = array<i64: 8, 128>}, {transform_indices = @transform_13, window_bounds = array<i64: 8, 128>}]} {
    %c0 = arith.constant 0 : index
    %c0_0 = arith.constant 0 : index
    %0 = vector.load %arg1[%c0, %c0_0] : memref<8x128xf32, #tpu.memory_space<vmem>>, vector<8x128xf32>
    %1 = arith.truncf %0 : vector<8x128xf32> to vector<8x128xbf16>
    %c0_1 = arith.constant 0 : index
    %c0_2 = arith.constant 0 : index
    %2 = vector.load %arg4[%c0_1, %c0_2] : memref<128x128xbf16, #tpu.memory_space<vmem>>, vector<128x128xbf16>
    %cst = arith.constant dense<0.000000e+00> : vector<8x128xf32>
    %3 = tpu.matmul %1, %2, %cst {dimension_numbers = #tpu.dot_dimension_numbers<[1], [0], [0], [1], [0, 0, 1, 1], [], []>} : vector<8x128xbf16>, vector<128x128xbf16>, vector<8x128xf32> -> vector<8x128xf32>
    %c0_3 = arith.constant 0 : index
    %c0_4 = arith.constant 0 : index
    %4 = vector.load %arg5[%c0_3, %c0_4] : memref<1x128xf32, #tpu.memory_space<vmem>>, vector<1x128xf32>
    %5 = vector.broadcast %4 : vector<1x128xf32> to vector<8x128xf32>
    %6 = arith.addf %3, %5 : vector<8x128xf32>
    %cst_5 = arith.constant 0.000000e+00 : f32
    %7 = vector.broadcast %cst_5 : f32 to vector<8x128xf32>
    %8 = arith.maximumf %6, %7 : vector<8x128xf32>
    %9 = arith.truncf %8 : vector<8x128xf32> to vector<8x128xbf16>
    %c0_6 = arith.constant 0 : index
    %c0_7 = arith.constant 0 : index
    %10 = vector.load %arg6[%c0_6, %c0_7] : memref<128x128xbf16, #tpu.memory_space<vmem>>, vector<128x128xbf16>
    %cst_8 = arith.constant dense<0.000000e+00> : vector<8x128xf32>
    %11 = tpu.matmul %9, %10, %cst_8 {dimension_numbers = #tpu.dot_dimension_numbers<[1], [0], [0], [1], [0, 0, 1, 1], [], []>} : vector<8x128xbf16>, vector<128x128xbf16>, vector<8x128xf32> -> vector<8x128xf32>
    %c0_9 = arith.constant 0 : index
    %c0_10 = arith.constant 0 : index
    %12 = vector.load %arg7[%c0_9, %c0_10] : memref<1x128xf32, #tpu.memory_space<vmem>>, vector<1x128xf32>
    %13 = vector.broadcast %12 : vector<1x128xf32> to vector<8x128xf32>
    %14 = arith.addf %11, %13 : vector<8x128xf32>
    %cst_11 = arith.constant 0.000000e+00 : f32
    %15 = vector.broadcast %cst_11 : f32 to vector<8x128xf32>
    %16 = arith.maximumf %14, %15 : vector<8x128xf32>
    %17 = arith.truncf %16 : vector<8x128xf32> to vector<8x128xbf16>
    %c0_12 = arith.constant 0 : index
    %c0_13 = arith.constant 0 : index
    %18 = vector.load %arg8[%c0_12, %c0_13] : memref<128x128xbf16, #tpu.memory_space<vmem>>, vector<128x128xbf16>
    %cst_14 = arith.constant dense<0.000000e+00> : vector<8x128xf32>
    %19 = tpu.matmul %17, %18, %cst_14 {dimension_numbers = #tpu.dot_dimension_numbers<[1], [0], [0], [1], [0, 0, 1, 1], [], []>} : vector<8x128xbf16>, vector<128x128xbf16>, vector<8x128xf32> -> vector<8x128xf32>
    %c0_15 = arith.constant 0 : index
    %c0_16 = arith.constant 0 : index
    %20 = vector.load %arg9[%c0_15, %c0_16] : memref<1x128xf32, #tpu.memory_space<vmem>>, vector<1x128xf32>
    %21 = vector.broadcast %20 : vector<1x128xf32> to vector<8x128xf32>
    %22 = arith.addf %19, %21 : vector<8x128xf32>
    %cst_17 = arith.constant 0.000000e+00 : f32
    %23 = vector.broadcast %cst_17 : f32 to vector<8x128xf32>
    %24 = arith.maximumf %22, %23 : vector<8x128xf32>
    %c0_18 = arith.constant 0 : index
    %c0_19 = arith.constant 0 : index
    %25 = vector.load %arg10[%c0_18, %c0_19] : memref<128x256xf32, #tpu.memory_space<vmem>>, vector<128x256xf32>
    %cst_20 = arith.constant dense<0.000000e+00> : vector<8x256xf32>
    %26 = tpu.matmul %24, %25, %cst_20 {dimension_numbers = #tpu.dot_dimension_numbers<[1], [0], [0], [1], [0, 0, 1, 1], [], []>} : vector<8x128xf32>, vector<128x256xf32>, vector<8x256xf32> -> vector<8x256xf32>
    %c0_21 = arith.constant 0 : index
    %c0_22 = arith.constant 0 : index
    %27 = vector.load %arg11[%c0_21, %c0_22] : memref<1x256xf32, #tpu.memory_space<vmem>>, vector<1x256xf32>
    %28 = vector.broadcast %27 : vector<1x256xf32> to vector<8x256xf32>
    %29 = arith.addf %26, %28 : vector<8x256xf32>
    %30 = vector.extract_strided_slice %29 {offsets = [0, 0], sizes = [8, 128], strides = [1, 1]} : vector<8x256xf32> to vector<8x128xf32>
    %31 = vector.extract_strided_slice %29 {offsets = [0, 128], sizes = [8, 128], strides = [1, 1]} : vector<8x256xf32> to vector<8x128xf32>
    %cst_23 = arith.constant -11.5129251 : f32
    %cst_24 = arith.constant 1.60943794 : f32
    %32 = vector.broadcast %cst_23 : f32 to vector<8x128xf32>
    %33 = arith.maximumf %32, %31 : vector<8x128xf32>
    %34 = vector.broadcast %cst_24 : f32 to vector<8x128xf32>
    %35 = arith.minimumf %34, %33 : vector<8x128xf32>
    %36 = math.exp %35 : vector<8x128xf32>
    %c0_25 = arith.constant 0 : index
    %c0_26 = arith.constant 0 : index
    %37 = vector.load %arg2[%c0_25, %c0_26] : memref<8x128xf32, #tpu.memory_space<vmem>>, vector<8x128xf32>
    %38 = arith.mulf %36, %37 : vector<8x128xf32>
    %39 = arith.addf %30, %38 : vector<8x128xf32>
    %40 = math.tanh %39 : vector<8x128xf32>
    %41 = math.tanh %30 : vector<8x128xf32>
    %c0_27 = arith.constant 0 : index
    %c0_28 = arith.constant 0 : index
    %42 = vector.load %arg3[%c0_27, %c0_28] : memref<1x128xf32, #tpu.memory_space<vmem>>, vector<1x128xf32>
    %43 = arith.mulf %37, %37 : vector<8x128xf32>
    %cst_29 = arith.constant -5.000000e-01 : f32
    %44 = vector.broadcast %cst_29 : f32 to vector<8x128xf32>
    %45 = arith.mulf %44, %43 : vector<8x128xf32>
    %46 = arith.mulf %40, %40 : vector<8x128xf32>
    %cst_30 = arith.constant 1.000000e+00 : f32
    %47 = vector.broadcast %cst_30 : f32 to vector<8x128xf32>
    %48 = arith.subf %47, %46 : vector<8x128xf32>
    %cst_31 = arith.constant 9.99999997E-7 : f32
    %49 = vector.broadcast %cst_31 : f32 to vector<8x128xf32>
    %50 = arith.addf %48, %49 : vector<8x128xf32>
    %51 = math.log %50 : vector<8x128xf32>
    %52 = arith.addf %35, %51 : vector<8x128xf32>
    %53 = vector.broadcast %42 : vector<1x128xf32> to vector<8x128xf32>
    %54 = arith.mulf %52, %53 : vector<8x128xf32>
    %55 = arith.subf %45, %54 : vector<8x128xf32>
    %cst_32 = arith.constant dense<0.000000e+00> : vector<8xf32>
    %56 = vector.multi_reduction <add>, %55, %cst_32 [1] : vector<8x128xf32> to vector<8xf32>
    %57 = vector.shape_cast %56 : vector<8xf32> to vector<8x1xf32>
    %cst_33 = arith.constant 7.35150814 : f32
    %58 = vector.broadcast %cst_33 : f32 to vector<8x1xf32>
    %59 = arith.subf %57, %58 : vector<8x1xf32>
    %c0_34 = arith.constant 0 : index
    %c0_35 = arith.constant 0 : index
    %60 = vector.load %arg12[%c0_34, %c0_35] : memref<8x128xf32, #tpu.memory_space<vmem>>, vector<8x128xf32>
    tpu.vector_store %arg12[%c0_34, %c0_35], %40 {strides = array<i32>} : memref<8x128xf32, #tpu.memory_space<vmem>>, vector<8x128xf32>,
    %c0_36 = arith.constant 0 : index
    %c0_37 = arith.constant 0 : index
    %61 = vector.load %arg14[%c0_36, %c0_37] : memref<8x128xf32, #tpu.memory_space<vmem>>, vector<8x128xf32>
    tpu.vector_store %arg14[%c0_36, %c0_37], %41 {strides = array<i32>} : memref<8x128xf32, #tpu.memory_space<vmem>>, vector<8x128xf32>,
    %62 = vector.shape_cast %59 : vector<8x1xf32> to vector<8x1xf32>
    %63 = vector.broadcast %62 : vector<8x1xf32> to vector<8x128xf32>
    %c0_38 = arith.constant 0 : index
    %c0_39 = arith.constant 0 : index
    %64 = vector.load %arg13[%c0_38, %c0_39] : memref<8x128xf32, #tpu.memory_space<vmem>>, vector<8x128xf32>
    tpu.vector_store %arg13[%c0_38, %c0_39], %63 {strides = array<i32>} : memref<8x128xf32, #tpu.memory_space<vmem>>, vector<8x128xf32>,
    return
  }
  func.func @transform_0(%arg0: i32) -> (i32, i32) {
    %c0_i32 = arith.constant 0 : i32
    %c0_i32_0 = arith.constant 0 : i32
    return %arg0, %c0_i32 : i32, i32
  }
  func.func @transform_1(%arg0: i32) -> (i32, i32) {
    %c0_i32 = arith.constant 0 : i32
    %c0_i32_0 = arith.constant 0 : i32
    return %arg0, %c0_i32 : i32, i32
  }
  func.func @transform_2(%arg0: i32) -> (i32, i32) {
    %c0_i32 = arith.constant 0 : i32
    %c0_i32_0 = arith.constant 0 : i32
    %c0_i32_1 = arith.constant 0 : i32
    return %c0_i32, %c0_i32_0 : i32, i32
  }
  func.func @transform_3(%arg0: i32) -> (i32, i32) {
    %c0_i32 = arith.constant 0 : i32
    %c0_i32_0 = arith.constant 0 : i32
    %c0_i32_1 = arith.constant 0 : i32
    return %c0_i32, %c0_i32_0 : i32, i32
  }
  func.func @transform_4(%arg0: i32) -> (i32, i32) {
    %c0_i32 = arith.constant 0 : i32
    %c0_i32_0 = arith.constant 0 : i32
    %c0_i32_1 = arith.constant 0 : i32
    return %c0_i32, %c0_i32_0 : i32, i32
  }
  func.func @transform_5(%arg0: i32) -> (i32, i32) {
    %c0_i32 = arith.constant 0 : i32
    %c0_i32_0 = arith.constant 0 : i32
    %c0_i32_1 = arith.constant 0 : i32
    return %c0_i32, %c0_i32_0 : i32, i32
  }
  func.func @transform_6(%arg0: i32) -> (i32, i32) {
    %c0_i32 = arith.constant 0 : i32
    %c0_i32_0 = arith.constant 0 : i32
    %c0_i32_1 = arith.constant 0 : i32
    return %c0_i32, %c0_i32_0 : i32, i32
  }
  func.func @transform_7(%arg0: i32) -> (i32, i32) {
    %c0_i32 = arith.constant 0 : i32
    %c0_i32_0 = arith.constant 0 : i32
    %c0_i32_1 = arith.constant 0 : i32
    return %c0_i32, %c0_i32_0 : i32, i32
  }
  func.func @transform_8(%arg0: i32) -> (i32, i32) {
    %c0_i32 = arith.constant 0 : i32
    %c0_i32_0 = arith.constant 0 : i32
    %c0_i32_1 = arith.constant 0 : i32
    return %c0_i32, %c0_i32_0 : i32, i32
  }
  func.func @transform_9(%arg0: i32) -> (i32, i32) {
    %c0_i32 = arith.constant 0 : i32
    %c0_i32_0 = arith.constant 0 : i32
    %c0_i32_1 = arith.constant 0 : i32
    return %c0_i32, %c0_i32_0 : i32, i32
  }
  func.func @transform_10(%arg0: i32) -> (i32, i32) {
    %c0_i32 = arith.constant 0 : i32
    %c0_i32_0 = arith.constant 0 : i32
    %c0_i32_1 = arith.constant 0 : i32
    return %c0_i32, %c0_i32_0 : i32, i32
  }
  func.func @transform_11(%arg0: i32) -> (i32, i32) {
    %c0_i32 = arith.constant 0 : i32
    %c0_i32_0 = arith.constant 0 : i32
    return %arg0, %c0_i32 : i32, i32
  }
  func.func @transform_12(%arg0: i32) -> (i32, i32) {
    %c0_i32 = arith.constant 0 : i32
    %c0_i32_0 = arith.constant 0 : i32
    return %arg0, %c0_i32 : i32, i32
  }
  func.func @transform_13(%arg0: i32) -> (i32, i32) {
    %c0_i32 = arith.constant 0 : i32
    %c0_i32_0 = arith.constant 0 : i32
    return %arg0, %c0_i32 : i32, i32
  }
}

</mosaic_0001>

<llo_original>
// kernel: actor_forward.1
$region0: #{actor_forward.1}
  #allocation0 [shape = 'u32[]', space=smem, size = 0x4, offset = 0x4, fixed_abs, tag = 'smem constant byte address 0x4 - core index']
  #allocation1 [shape = 'u32[72,128]{1,0:T(1,128)}', space=vmem, size = 0x9000, scoped, tag = 'internal scratch']
  %s0 = inlined_call_operand.vmem [shape: f32[8,128], index: 0, kind: input, shape index: {}]
  %s1 = inlined_call_operand.vmem [shape: f32[8,128], index: 1, kind: input, shape index: {}]
  %s2 = inlined_call_operand.vmem [shape: f32[1,128], index: 2, kind: input, shape index: {}]
  %s3 = inlined_call_operand.vmem [shape: bf16[128,128], index: 3, kind: input, shape index: {}]
  %s4 = inlined_call_operand.vmem [shape: f32[1,128], index: 4, kind: input, shape index: {}]
  %s5 = inlined_call_operand.vmem [shape: bf16[128,128], index: 5, kind: input, shape index: {}]
  %s6 = inlined_call_operand.vmem [shape: f32[1,128], index: 6, kind: input, shape index: {}]
  %s7 = inlined_call_operand.vmem [shape: bf16[128,128], index: 7, kind: input, shape index: {}]
  %s8 = inlined_call_operand.vmem [shape: f32[1,128], index: 8, kind: input, shape index: {}]
  %s9 = inlined_call_operand.vmem [shape: f32[128,256], index: 9, kind: input, shape index: {}]
  %s10 = inlined_call_operand.vmem [shape: f32[1,256], index: 10, kind: input, shape index: {}]
  %s11 = inlined_call_operand.hbm [shape: f32[8,128], index: 11, kind: output, shape index: {0}]
  %s12 = inlined_call_operand.vmem [shape: f32[8,128], index: 12, kind: output, shape index: {1}]
  %s13 = inlined_call_operand.hbm [shape: f32[8,128], index: 13, kind: output, shape index: {2}]
  %14 = xla_tuple %s11, %s12, %s13
  %s15 = sld [smem:[#allocation0]]
  $region70: #{actor_forward.1} parent=0
    _
  %s17 = ssub.s32 1, %s15
  %s18 = scalar_select 0, %s17, %s15
  $region1: #{actor_forward.1} parent=0
    #allocation2 [shape = 'u8[4096]{0}', space=vmem, size = 0x1000, scoped, tag = 'output window, operand 0, single buffered']
    #allocation3 [shape = 's32[1]{0}', space=sflag, size = 0x4, scoped, tag = 'scoped memory for actor_forward.1']
    #allocation4 [shape = 'u8[4096]{0}', space=vmem, size = 0x1000, scoped, tag = 'output window, operand 2, single buffered']
    #allocation5 [shape = 's32[1]{0}', space=sflag, size = 0x4, scoped, tag = 'scoped memory for actor_forward.1']
    %19 = vsyncpa [#allocation3], 0
    %20 = vsyncpa [#allocation5], 0
    // Predicated region
    $region2: #{actor_forward.1} parent=1 // pred_check
      _
    $region3: #{actor_forward.1} parent=1 // pred_check_branch
      %22 = sbr.rel (0) target = $region5
    $region4: #{actor_forward.1} parent=1 // pred_region
      _
    $region5: #{actor_forward.1} parent=1 // pred_fallthru
      _
    // Predicated region
    $region6: #{actor_forward.1} parent=1 // pred_check
      _
    $region7: #{actor_forward.1} parent=1 // pred_check_branch
      %24 = sbr.rel (0) target = $region9
    $region8: #{actor_forward.1} parent=1 // pred_region
      _
    $region9: #{actor_forward.1} parent=1 // pred_fallthru
      _
    // Predicated region
    $region10: #{actor_forward.1} parent=1 // pred_check
      _
    $region11: #{actor_forward.1} parent=1 // pred_check_branch
      %26 = sbr.rel (0) target = $region13
    $region12: #{actor_forward.1} parent=1 // pred_region
      _
    $region13: #{actor_forward.1} parent=1 // pred_fallthru
      _
    // Predicated region
    $region14: #{actor_forward.1} parent=1 // pred_check
      _
    $region15: #{actor_forward.1} parent=1 // pred_check_branch
      %28 = sbr.rel (0) target = $region17
    $region16: #{actor_forward.1} parent=1 // pred_region
      _
    $region17: #{actor_forward.1} parent=1 // pred_fallthru
      _
    // Predicated region
    $region18: #{actor_forward.1} parent=1 // pred_check
      _
    $region19: #{actor_forward.1} parent=1 // pred_check_branch
      %30 = sbr.rel (0) target = $region21
    $region20: #{actor_forward.1} parent=1 // pred_region
      _
    $region21: #{actor_forward.1} parent=1 // pred_fallthru
      _
    // Predicated region
    $region22: #{actor_forward.1} parent=1 // pred_check
      _
    $region23: #{actor_forward.1} parent=1 // pred_check_branch
      %32 = sbr.rel (0) target = $region25
    $region24: #{actor_forward.1} parent=1 // pred_region
      _
    $region25: #{actor_forward.1} parent=1 // pred_fallthru
      _
    // Predicated region
    $region26: #{actor_forward.1} parent=1 // pred_check
      _
    $region27: #{actor_forward.1} parent=1 // pred_check_branch
      %34 = sbr.rel (0) target = $region29
    $region28: #{actor_forward.1} parent=1 // pred_region
      _
    $region29: #{actor_forward.1} parent=1 // pred_fallthru
      _
    // Predicated region
    $region30: #{actor_forward.1} parent=1 // pred_check
      _
    $region31: #{actor_forward.1} parent=1 // pred_check_branch
      %36 = sbr.rel (0) target = $region33
    $region32: #{actor_forward.1} parent=1 // pred_region
      _
    $region33: #{actor_forward.1} parent=1 // pred_fallthru
      _
    // Predicated region
    $region34: #{actor_forward.1} parent=1 // pred_check
      _
    $region35: #{actor_forward.1} parent=1 // pred_check_branch
      %38 = sbr.rel (0) target = $region37
    $region36: #{actor_forward.1} parent=1 // pred_region
      _
    $region37: #{actor_forward.1} parent=1 // pred_fallthru
      _
    // Predicated region
    $region38: #{actor_forward.1} parent=1 // pred_check
      _
    $region39: #{actor_forward.1} parent=1 // pred_check_branch
      %40 = sbr.rel (0) target = $region41
    $region40: #{actor_forward.1} parent=1 // pred_region
      _
    $region41: #{actor_forward.1} parent=1 // pred_fallthru
      _
    // Predicated region
    $region42: #{actor_forward.1} parent=1 // pred_check
      _
    $region43: #{actor_forward.1} parent=1 // pred_check_branch
      %42 = sbr.rel (0) target = $region45
    $region44: #{actor_forward.1} parent=1 // pred_region
      _
    $region45: #{actor_forward.1} parent=1 // pred_fallthru
      _
    %v43 = vld [vmem:[%s0] sm:$0xff]
    %v44 = vpack.c.bf16 %v43, %v43
    %v45 = vld [vmem:[%s3] sm:$0xf]
    %v46 = vld [vmem:[%s3 + $0x4] sm:$0xf]
    %v47 = vld [vmem:[%s3 + $0x8] sm:$0xf]
    %v48 = vld [vmem:[%s3 + $0xc] sm:$0xf]
    %v49 = vld [vmem:[%s3 + $0x10] sm:$0xf]
    %v50 = vld [vmem:[%s3 + $0x14] sm:$0xf]
    %v51 = vld [vmem:[%s3 + $0x18] sm:$0xf]
    %v52 = vld [vmem:[%s3 + $0x1c] sm:$0xf]
    %v53 = vld [vmem:[%s3 + $0x20] sm:$0xf]
    %v54 = vld [vmem:[%s3 + $0x24] sm:$0xf]
    %v55 = vld [vmem:[%s3 + $0x28] sm:$0xf]
    %v56 = vld [vmem:[%s3 + $0x2c] sm:$0xf]
    %v57 = vld [vmem:[%s3 + $0x30] sm:$0xf]
    %v58 = vld [vmem:[%s3 + $0x34] sm:$0xf]
    %v59 = vld [vmem:[%s3 + $0x38] sm:$0xf]
    %v60 = vld [vmem:[%s3 + $0x3c] sm:$0xf]
    %v61 = vld [vmem:[%s4] sm:$0x1]
    %v63 = vperm.slane %v61, 0
    %v81 = vunpack.c.l.b16 %v45
    %v82 = vunpack.c.l.b16 %v46
    %v83 = vunpack.c.l.b16 %v47
    %v84 = vunpack.c.l.b16 %v48
    %v85 = vunpack.c.l.b16 %v49
    %v86 = vunpack.c.l.b16 %v50
    %v87 = vunpack.c.l.b16 %v51
    %v88 = vunpack.c.l.b16 %v52
    %v89 = vunpack.c.l.b16 %v53
    %v90 = vunpack.c.l.b16 %v54
    %v91 = vunpack.c.l.b16 %v55
    %v92 = vunpack.c.l.b16 %v56
    %v93 = vunpack.c.l.b16 %v57
    %v94 = vunpack.c.l.b16 %v58
    %v95 = vunpack.c.l.b16 %v59
    %v96 = vunpack.c.l.b16 %v60
    %v97 = vpack.c.b16 %v82, %v81
    %v98 = vpack.c.b16 %v84, %v83
    %v99 = vpack.c.b16 %v86, %v85
    %v100 = vpack.c.b16 %v88, %v87
    %v101 = vpack.c.b16 %v90, %v89
    %v102 = vpack.c.b16 %v92, %v91
    %v103 = vpack.c.b16 %v94, %v93
    %v104 = vpack.c.b16 %v96, %v95
    %113 = vmatpush.bf16.msra.mxu0 %v104
    %114 = vmatpush.bf16.msra.mxu0 %v103
    %115 = vmatpush.bf16.msra.mxu0 %v102
    %116 = vmatpush.bf16.msra.mxu0 %v101
    %117 = vmatpush.bf16.msra.mxu0 %v100
    %118 = vmatpush.bf16.msra.mxu0 %v99
    %119 = vmatpush.bf16.msra.mxu0 %v98
    %120 = vmatpush.bf16.msra.mxu0 %v97
    %121 = vmatmul.bf16.gmra.mxu0 %v44
    %v122 = vpop.f32.mrf.mxu0
    %v123 = vadd.f32 %v63, %v122
    %v124 = vpop.f32.mrf.mxu0
    %125 = vdwg.mxu0
    %v126 = vmax.f32 %v123, 0.0
    %v127 = vpack.c.bf16 %v126, %v126
    %v128 = vld [vmem:[%s5] sm:$0xf]
    %v129 = vld [vmem:[%s5 + $0x4] sm:$0xf]
    %v130 = vld [vmem:[%s5 + $0x8] sm:$0xf]
    %v131 = vld [vmem:[%s5 + $0xc] sm:$0xf]
    %v132 = vld [vmem:[%s5 + $0x10] sm:$0xf]
    %v133 = vld [vmem:[%s5 + $0x14] sm:$0xf]
    %v134 = vld [vmem:[%s5 + $0x18] sm:$0xf]
    %v135 = vld [vmem:[%s5 + $0x1c] sm:$0xf]
    %v136 = vld [vmem:[%s5 + $0x20] sm:$0xf]
    %v137 = vld [vmem:[%s5 + $0x24] sm:$0xf]
    %v138 = vld [vmem:[%s5 + $0x28] sm:$0xf]
    %v139 = vld [vmem:[%s5 + $0x2c] sm:$0xf]
    %v140 = vld [vmem:[%s5 + $0x30] sm:$0xf]
    %v141 = vld [vmem:[%s5 + $0x34] sm:$0xf]
    %v142 = vld [vmem:[%s5 + $0x38] sm:$0xf]
    %v143 = vld [vmem:[%s5 + $0x3c] sm:$0xf]
    %v144 = vld [vmem:[%s6] sm:$0x1]
    %v146 = vperm.slane %v144, 0
    %v164 = vunpack.c.l.b16 %v128
    %v165 = vunpack.c.l.b16 %v129
    %v166 = vunpack.c.l.b16 %v130
    %v167 = vunpack.c.l.b16 %v131
    %v168 = vunpack.c.l.b16 %v132
    %v169 = vunpack.c.l.b16 %v133
    %v170 = vunpack.c.l.b16 %v134
    %v171 = vunpack.c.l.b16 %v135
    %v172 = vunpack.c.l.b16 %v136
    %v173 = vunpack.c.l.b16 %v137
    %v174 = vunpack.c.l.b16 %v138
    %v175 = vunpack.c.l.b16 %v139
    %v176 = vunpack.c.l.b16 %v140
    %v177 = vunpack.c.l.b16 %v141
    %v178 = vunpack.c.l.b16 %v142
    %v179 = vunpack.c.l.b16 %v143
    %v180 = vpack.c.b16 %v165, %v164
    %v181 = vpack.c.b16 %v167, %v166
    %v182 = vpack.c.b16 %v169, %v168
    %v183 = vpack.c.b16 %v171, %v170
    %v184 = vpack.c.b16 %v173, %v172
    %v185 = vpack.c.b16 %v175, %v174
    %v186 = vpack.c.b16 %v177, %v176
    %v187 = vpack.c.b16 %v179, %v178
    %196 = vmatpush.bf16.msra.mxu0 %v187
    %197 = vmatpush.bf16.msra.mxu0 %v186
    %198 = vmatpush.bf16.msra.mxu0 %v185
    %199 = vmatpush.bf16.msra.mxu0 %v184
    %200 = vmatpush.bf16.msra.mxu0 %v183
    %201 = vmatpush.bf16.msra.mxu0 %v182
    %202 = vmatpush.bf16.msra.mxu0 %v181
    %203 = vmatpush.bf16.msra.mxu0 %v180
    %204 = vmatmul.bf16.gmra.mxu0 %v127
    %v205 = vpop.f32.mrf.mxu0
    %v206 = vadd.f32 %v146, %v205
    %v207 = vpop.f32.mrf.mxu0
    %208 = vdwg.mxu0
    %v209 = vmax.f32 %v206, 0.0
    %v210 = vpack.c.bf16 %v209, %v209
    %v211 = vld [vmem:[%s7] sm:$0xf]
    %v212 = vld [vmem:[%s7 + $0x4] sm:$0xf]
    %v213 = vld [vmem:[%s7 + $0x8] sm:$0xf]
    %v214 = vld [vmem:[%s7 + $0xc] sm:$0xf]
    %v215 = vld [vmem:[%s7 + $0x10] sm:$0xf]
    %v216 = vld [vmem:[%s7 + $0x14] sm:$0xf]
    %v217 = vld [vmem:[%s7 + $0x18] sm:$0xf]
    %v218 = vld [vmem:[%s7 + $0x1c] sm:$0xf]
    %v219 = vld [vmem:[%s7 + $0x20] sm:$0xf]
    %v220 = vld [vmem:[%s7 + $0x24] sm:$0xf]
    %v221 = vld [vmem:[%s7 + $0x28] sm:$0xf]
    %v222 = vld [vmem:[%s7 + $0x2c] sm:$0xf]
    %v223 = vld [vmem:[%s7 + $0x30] sm:$0xf]
    %v224 = vld [vmem:[%s7 + $0x34] sm:$0xf]
    %v225 = vld [vmem:[%s7 + $0x38] sm:$0xf]
    %v226 = vld [vmem:[%s7 + $0x3c] sm:$0xf]
    %v227 = vld [vmem:[%s8] sm:$0x1]
    %v229 = vperm.slane %v227, 0
    %v247 = vunpack.c.l.b16 %v211
    %v248 = vunpack.c.l.b16 %v212
    %v249 = vunpack.c.l.b16 %v213
    %v250 = vunpack.c.l.b16 %v214
    %v251 = vunpack.c.l.b16 %v215
    %v252 = vunpack.c.l.b16 %v216
    %v253 = vunpack.c.l.b16 %v217
    %v254 = vunpack.c.l.b16 %v218
    %v255 = vunpack.c.l.b16 %v219
    %v256 = vunpack.c.l.b16 %v220
    %v257 = vunpack.c.l.b16 %v221
    %v258 = vunpack.c.l.b16 %v222
    %v259 = vunpack.c.l.b16 %v223
    %v260 = vunpack.c.l.b16 %v224
    %v261 = vunpack.c.l.b16 %v225
    %v262 = vunpack.c.l.b16 %v226
    %v263 = vpack.c.b16 %v248, %v247
    %v264 = vpack.c.b16 %v250, %v249
    %v265 = vpack.c.b16 %v252, %v251
    %v266 = vpack.c.b16 %v254, %v253
    %v267 = vpack.c.b16 %v256, %v255
    %v268 = vpack.c.b16 %v258, %v257
    %v269 = vpack.c.b16 %v260, %v259
    %v270 = vpack.c.b16 %v262, %v261
    %279 = vmatpush.bf16.msra.mxu0 %v270
    %280 = vmatpush.bf16.msra.mxu0 %v269
    %281 = vmatpush.bf16.msra.mxu0 %v268
    %282 = vmatpush.bf16.msra.mxu0 %v267
    %283 = vmatpush.bf16.msra.mxu0 %v266
    %284 = vmatpush.bf16.msra.mxu0 %v265
    %285 = vmatpush.bf16.msra.mxu0 %v264
    %286 = vmatpush.bf16.msra.mxu0 %v263
    %287 = vmatmul.bf16.gmra.mxu0 %v210
    %v288 = vpop.f32.mrf.mxu0
    %v289 = vadd.f32 %v229, %v288
    %v290 = vpop.f32.mrf.mxu0
    %291 = vdwg.mxu0
    %v292 = vmax.f32 %v289, 0.0
    %v293 = vld [vmem:[%s9] sm:$0xff]
    %v294 = vld [vmem:[%s9 + $0x8] sm:$0xff]
    %v295 = vld [vmem:[%s9 + $0x10] sm:$0xff]
    %v296 = vld [vmem:[%s9 + $0x18] sm:$0xff]
    %v297 = vld [vmem:[%s9 + $0x20] sm:$0xff]
    %v298 = vld [vmem:[%s9 + $0x28] sm:$0xff]
    %v299 = vld [vmem:[%s9 + $0x30] sm:$0xff]
    %v300 = vld [vmem:[%s9 + $0x38] sm:$0xff]
    %v301 = vld [vmem:[%s9 + $0x40] sm:$0xff]
    %v302 = vld [vmem:[%s9 + $0x48] sm:$0xff]
    %v303 = vld [vmem:[%s9 + $0x50] sm:$0xff]
    %v304 = vld [vmem:[%s9 + $0x58] sm:$0xff]
    %v305 = vld [vmem:[%s9 + $0x60] sm:$0xff]
    %v306 = vld [vmem:[%s9 + $0x68] sm:$0xff]
    %v307 = vld [vmem:[%s9 + $0x70] sm:$0xff]
    %v308 = vld [vmem:[%s9 + $0x78] sm:$0xff]
    %v309 = vld [vmem:[%s9 + $0x80] sm:$0xff]
    %v310 = vld [vmem:[%s9 + $0x88] sm:$0xff]
    %v311 = vld [vmem:[%s9 + $0x90] sm:$0xff]
    %v312 = vld [vmem:[%s9 + $0x98] sm:$0xff]
    %v313 = vld [vmem:[%s9 + $0xa0] sm:$0xff]
    %v314 = vld [vmem:[%s9 + $0xa8] sm:$0xff]
    %v315 = vld [vmem:[%s9 + $0xb0] sm:$0xff]
    %v316 = vld [vmem:[%s9 + $0xb8] sm:$0xff]
    %v317 = vld [vmem:[%s9 + $0xc0] sm:$0xff]
    %v318 = vld [vmem:[%s9 + $0xc8] sm:$0xff]
    %v319 = vld [vmem:[%s9 + $0xd0] sm:$0xff]
    %v320 = vld [vmem:[%s9 + $0xd8] sm:$0xff]
    %v321 = vld [vmem:[%s9 + $0xe0] sm:$0xff]
    %v322 = vld [vmem:[%s9 + $0xe8] sm:$0xff]
    %v323 = vld [vmem:[%s9 + $0xf0] sm:$0xff]
    %v324 = vld [vmem:[%s9 + $0xf8] sm:$0xff]
    %v325 = vld [vmem:[%s10] sm:$0x3]
    %v327 = vperm.slane %v325, 0
    %v328 = vperm.slane %v325, 1
    %331 = vmatpush.msra.mxu0 %v323
    %332 = vmatpush.msra.mxu0 %v321
    %333 = vmatpush.msra.mxu0 %v319
    %334 = vmatpush.msra.mxu0 %v317
    %335 = vmatpush.msra.mxu0 %v315
    %336 = vmatpush.msra.mxu0 %v313
    %337 = vmatpush.msra.mxu0 %v311
    %338 = vmatpush.msra.mxu0 %v309
    %339 = vmatpush.msra.mxu0 %v307
    %340 = vmatpush.msra.mxu0 %v305
    %341 = vmatpush.msra.mxu0 %v303
    %342 = vmatpush.msra.mxu0 %v301
    %343 = vmatpush.msra.mxu0 %v299
    %344 = vmatpush.msra.mxu0 %v297
    %345 = vmatpush.msra.mxu0 %v295
    %346 = vmatpush.msra.mxu0 %v293
    %347 = vmatmul.f32.gmra.mxu0 %v292
    %v348 = vpop.f32.mrf.mxu0
    %v349 = vadd.f32 %v327, %v348
    %350 = vdwg.mxu0
    %351 = vmatpush.msra.mxu0 %v324
    %352 = vmatpush.msra.mxu0 %v322
    %353 = vmatpush.msra.mxu0 %v320
    %354 = vmatpush.msra.mxu0 %v318
    %355 = vmatpush.msra.mxu0 %v316
    %356 = vmatpush.msra.mxu0 %v314
    %357 = vmatpush.msra.mxu0 %v312
    %358 = vmatpush.msra.mxu0 %v310
    %359 = vmatpush.msra.mxu0 %v308
    %360 = vmatpush.msra.mxu0 %v306
    %361 = vmatpush.msra.mxu0 %v304
    %362 = vmatpush.msra.mxu0 %v302
    %363 = vmatpush.msra.mxu0 %v300
    %364 = vmatpush.msra.mxu0 %v298
    %365 = vmatpush.msra.mxu0 %v296
    %366 = vmatpush.msra.mxu0 %v294
    %367 = vmatmul.f32.gmra.mxu0 %v292
    %v368 = vpop.f32.mrf.mxu0
    %v369 = vadd.f32 %v328, %v368
    %370 = vdwg.mxu0
    %v371 = vmax.f32 %v369, -11.512925
    %v372 = vmin.f32 %v371, 1.609438
    %v373 = vmul.f32 %v372, 1.442695
    %v374 = vpow.pop %v373
    %v375 = vld [vmem:[%s1] sm:$0xff]
    %v376 = vmul.f32 %v374, %v375
    %v377 = vadd.f32 %v349, %v376
    %v378 = vtanh.pop %v377
    %v379 = vtanh.pop %v349
    %v380 = vld [vmem:[%s2] sm:$0x1]
    %v381 = vmul.f32 %v375, %v375
    %v382 = vmul.f32 %v381, -0.5
    %v383 = vmul.f32 %v378, %v378
    %v384 = vsub.f32 1.0, %v383
    %v385 = vadd.f32 %v384, 1e-06
    %v386 = vlog2.pop %v385
    %v387 = vmul.f32 %v386, 0.6931472
    %v388 = vadd.f32 %v372, %v387
    %v390 = vperm.slane %v380, 0
    %v392 = vmul.f32 %v388, %v390
    %v393 = vsub.f32 %v382, %v392
    %394 = vadd.xlane.f32.xlu0 %v393
    %v395 = vpop.xlane.xlu0 %394
    %v396 = vsub.f32 %v395, 7.351508
    %397 = vst [vmem:[#allocation2] sm:$0xff] %v378
    %398 = vst [vmem:[#allocation4] sm:$0xff] %v379
    %399 = vst [vmem:[%s12] sm:$0xff] %v396
    // Predicated region
    $region46: #{actor_forward.1} parent=1 // pred_check
      _
    $region47: #{actor_forward.1} parent=1 // pred_check_branch
      %401 = sbr.rel (0) target = $region49
    $region48: #{actor_forward.1} parent=1 // pred_region
      %403 = vsyncadd [#allocation3], 0
      %s405 = sshll.u32 [#allocation2], 4
      %s406 = int_to_ptr.vmem [resolvable:$true] %s405
      %s407 = sshll.u32 %s11, 4
      %s408 = int_to_ptr.hbm [resolvable:$true] %s407
      %410 = dma.vmem_to_hbm [thread:$0]  %s406, 128, %s408, [#allocation3]
    $region49: #{actor_forward.1} parent=1 // pred_fallthru
      _
    // Predicated region
    $region50: #{actor_forward.1} parent=1 // pred_check
      _
    $region51: #{actor_forward.1} parent=1 // pred_check_branch
      %412 = sbr.rel (0) target = $region53
    $region52: #{actor_forward.1} parent=1 // pred_region
      _
    $region53: #{actor_forward.1} parent=1 // pred_fallthru
      _
    // Predicated region
    $region54: #{actor_forward.1} parent=1 // pred_check
      _
    $region55: #{actor_forward.1} parent=1 // pred_check_branch
      %414 = sbr.rel (0) target = $region57
    $region56: #{actor_forward.1} parent=1 // pred_region
      %416 = vsyncadd [#allocation5], 0
      %s418 = sshll.u32 [#allocation4], 4
      %s419 = int_to_ptr.vmem [resolvable:$true] %s418
      %s420 = sshll.u32 %s13, 4
      %s421 = int_to_ptr.hbm [resolvable:$true] %s420
      %423 = dma.vmem_to_hbm [thread:$0]  %s419, 128, %s421, [#allocation5]
    $region57: #{actor_forward.1} parent=1 // pred_fallthru
      _
    // Predicated region
    $region58: #{actor_forward.1} parent=1 // pred_check
      _
    $region59: #{actor_forward.1} parent=1 // pred_check_branch
      %425 = sbr.rel (0) target = $region61
    $region60: #{actor_forward.1} parent=1 // pred_region
      %427 = dma.done [#allocation3], 128
    $region61: #{actor_forward.1} parent=1 // pred_fallthru
      _
    // Predicated region
    $region62: #{actor_forward.1} parent=1 // pred_check
      _
    $region63: #{actor_forward.1} parent=1 // pred_check_branch
      %429 = sbr.rel (0) target = $region65
    $region64: #{actor_forward.1} parent=1 // pred_region
      _
    $region65: #{actor_forward.1} parent=1 // pred_fallthru
      _
    // Predicated region
    $region66: #{actor_forward.1} parent=1 // pred_check
      _
    $region67: #{actor_forward.1} parent=1 // pred_check_branch
      %431 = sbr.rel (0) target = $region69
    $region68: #{actor_forward.1} parent=1 // pred_region
      %433 = dma.done [#allocation5], 128
    $region69: #{actor_forward.1} parent=1 // pred_fallthru
      _
    %434 = vsyncpa [#allocation3], 1
    %435 = vsyncpa [#allocation5], 1

// kernel: actor_forward.1
$region0: #{actor_forward.1}
  #allocation0 [shape = 'u32[]', space=smem, size = 0x4, offset = 0x4, fixed_abs, tag = 'smem constant byte address 0x4 - core index']
  #allocation1 [shape = 'u32[72,128]{1,0:T(1,128)}', space=vmem, size = 0x9000, scoped, tag = 'internal scratch']
  %s0 = inlined_call_operand.vmem [shape: f32[8,128], index: 0, kind: input, shape index: {}]
  %s1 = inlined_call_operand.vmem [shape: f32[8,128], index: 1, kind: input, shape index: {}]
  %s2 = inlined_call_operand.vmem [shape: f32[1,128], index: 2, kind: input, shape index: {}]
  %s3 = inlined_call_operand.vmem [shape: bf16[128,128], index: 3, kind: input, shape index: {}]
  %s4 = inlined_call_operand.vmem [shape: f32[1,128], index: 4, kind: input, shape index: {}]
  %s5 = inlined_call_operand.vmem [shape: bf16[128,128], index: 5, kind: input, shape index: {}]
  %s6 = inlined_call_operand.vmem [shape: f32[1,128], index: 6, kind: input, shape index: {}]
  %s7 = inlined_call_operand.vmem [shape: bf16[128,128], index: 7, kind: input, shape index: {}]
  %s8 = inlined_call_operand.vmem [shape: f32[1,128], index: 8, kind: input, shape index: {}]
  %s9 = inlined_call_operand.vmem [shape: f32[128,256], index: 9, kind: input, shape index: {}]
  %s10 = inlined_call_operand.vmem [shape: f32[1,256], index: 10, kind: input, shape index: {}]
  %s11 = inlined_call_operand.hbm [shape: f32[8,128], index: 11, kind: output, shape index: {0}]
  %s12 = inlined_call_operand.vmem [shape: f32[8,128], index: 12, kind: output, shape index: {1}]
  %s13 = inlined_call_operand.hbm [shape: f32[8,128], index: 13, kind: output, shape index: {2}]
  %14 = xla_tuple %s11, %s12, %s13
  %s15 = sld [smem:[#allocation0]]
  $region70: #{actor_forward.1} parent=0
    _
  %s17 = ssub.s32 1, %s15
  %s18 = scalar_select 0, %s17, %s15
  $region1: #{actor_forward.1} parent=0
    #allocation2 [shape = 'u8[4096]{0}', space=vmem, size = 0x1000, scoped, tag = 'output window, operand 0, single buffered']
    #allocation3 [shape = 's32[1]{0}', space=sflag, size = 0x4, scoped, tag = 'scoped memory for actor_forward.1']
    #allocation4 [shape = 'u8[4096]{0}', space=vmem, size = 0x1000, scoped, tag = 'output window, operand 2, single buffered']
    #allocation5 [shape = 's32[1]{0}', space=sflag, size = 0x4, scoped, tag = 'scoped memory for actor_forward.1']
    %19 = vsyncpa [#allocation3], 0
    %20 = vsyncpa [#allocation5], 0
    // Predicated region
    $region2: #{actor_forward.1} parent=1 // pred_check
      _
    $region3: #{actor_forward.1} parent=1 // pred_check_branch
      %22 = sbr.rel (0) target = $region5
    $region4: #{actor_forward.1} parent=1 // pred_region
      _
    $region5: #{actor_forward.1} parent=1 // pred_fallthru
      _
    // Predicated region
    $region6: #{actor_forward.1} parent=1 // pred_check
      _
    $region7: #{actor_forward.1} parent=1 // pred_check_branch
      %24 = sbr.rel (0) target = $region9
    $region8: #{actor_forward.1} parent=1 // pred_region
      _
    $region9: #{actor_forward.1} parent=1 // pred_fallthru
      _
    // Predicated region
    $region10: #{actor_forward.1} parent=1 // pred_check
      _
    $region11: #{actor_forward.1} parent=1 // pred_check_branch
      %26 = sbr.rel (0) target = $region13
    $region12: #{actor_forward.1} parent=1 // pred_region
      _
    $region13: #{actor_forward.1} parent=1 // pred_fallthru
      _
    // Predicated region
    $region14: #{actor_forward.1} parent=1 // pred_check
      _
    $region15: #{actor_forward.1} parent=1 // pred_check_branch
      %28 = sbr.rel (0) target = $region17
    $region16: #{actor_forward.1} parent=1 // pred_region
      _
    $region17: #{actor_forward.1} parent=1 // pred_fallthru
      _
    // Predicated region
    $region18: #{actor_forward.1} parent=1 // pred_check
      _
    $region19: #{actor_forward.1} parent=1 // pred_check_branch
      %30 = sbr.rel (0) target = $region21
    $region20: #{actor_forward.1} parent=1 // pred_region
      _
    $region21: #{actor_forward.1} parent=1 // pred_fallthru
      _
    // Predicated region
    $region22: #{actor_forward.1} parent=1 // pred_check
      _
    $region23: #{actor_forward.1} parent=1 // pred_check_branch
      %32 = sbr.rel (0) target = $region25
    $region24: #{actor_forward.1} parent=1 // pred_region
      _
    $region25: #{actor_forward.1} parent=1 // pred_fallthru
      _
    // Predicated region
    $region26: #{actor_forward.1} parent=1 // pred_check
      _
    $region27: #{actor_forward.1} parent=1 // pred_check_branch
      %34 = sbr.rel (0) target = $region29
    $region28: #{actor_forward.1} parent=1 // pred_region
      _
    $region29: #{actor_forward.1} parent=1 // pred_fallthru
      _
    // Predicated region
    $region30: #{actor_forward.1} parent=1 // pred_check
      _
    $region31: #{actor_forward.1} parent=1 // pred_check_branch
      %36 = sbr.rel (0) target = $region33
    $region32: #{actor_forward.1} parent=1 // pred_region
      _
    $region33: #{actor_forward.1} parent=1 // pred_fallthru
      _
    // Predicated region
    $region34: #{actor_forward.1} parent=1 // pred_check
      _
    $region35: #{actor_forward.1} parent=1 // pred_check_branch
      %38 = sbr.rel (0) target = $region37
    $region36: #{actor_forward.1} parent=1 // pred_region
      _
    $region37: #{actor_forward.1} parent=1 // pred_fallthru
      _
    // Predicated region
    $region38: #{actor_forward.1} parent=1 // pred_check
      _
    $region39: #{actor_forward.1} parent=1 // pred_check_branch
      %40 = sbr.rel (0) target = $region41
    $region40: #{actor_forward.1} parent=1 // pred_region
      _
    $region41: #{actor_forward.1} parent=1 // pred_fallthru
      _
    // Predicated region
    $region42: #{actor_forward.1} parent=1 // pred_check
      _
    $region43: #{actor_forward.1} parent=1 // pred_check_branch
      %42 = sbr.rel (0) target = $region45
    $region44: #{actor_forward.1} parent=1 // pred_region
      _
    $region45: #{actor_forward.1} parent=1 // pred_fallthru
      _
    %v43 = vld [vmem:[%s0] sm:$0xff]
    %v44 = vpack.c.bf16 %v43, %v43
    %v45 = vld [vmem:[%s3] sm:$0xf]
    %v46 = vld [vmem:[%s3 + $0x4] sm:$0xf]
    %v47 = vld [vmem:[%s3 + $0x8] sm:$0xf]
    %v48 = vld [vmem:[%s3 + $0xc] sm:$0xf]
    %v49 = vld [vmem:[%s3 + $0x10] sm:$0xf]
    %v50 = vld [vmem:[%s3 + $0x14] sm:$0xf]
    %v51 = vld [vmem:[%s3 + $0x18] sm:$0xf]
    %v52 = vld [vmem:[%s3 + $0x1c] sm:$0xf]
    %v53 = vld [vmem:[%s3 + $0x20] sm:$0xf]
    %v54 = vld [vmem:[%s3 + $0x24] sm:$0xf]
    %v55 = vld [vmem:[%s3 + $0x28] sm:$0xf]
    %v56 = vld [vmem:[%s3 + $0x2c] sm:$0xf]
    %v57 = vld [vmem:[%s3 + $0x30] sm:$0xf]
    %v58 = vld [vmem:[%s3 + $0x34] sm:$0xf]
    %v59 = vld [vmem:[%s3 + $0x38] sm:$0xf]
    %v60 = vld [vmem:[%s3 + $0x3c] sm:$0xf]
    %v61 = vld [vmem:[%s4] sm:$0x1]
    %v63 = vperm.slane %v61, 0
    %v81 = vunpack.c.l.b16 %v45
    %v82 = vunpack.c.l.b16 %v46
    %v83 = vunpack.c.l.b16 %v47
    %v84 = vunpack.c.l.b16 %v48
    %v85 = vunpack.c.l.b16 %v49
    %v86 = vunpack.c.l.b16 %v50
    %v87 = vunpack.c.l.b16 %v51
    %v88 = vunpack.c.l.b16 %v52
    %v89 = vunpack.c.l.b16 %v53
    %v90 = vunpack.c.l.b16 %v54
    %v91 = vunpack.c.l.b16 %v55
    %v92 = vunpack.c.l.b16 %v56
    %v93 = vunpack.c.l.b16 %v57
    %v94 = vunpack.c.l.b16 %v58
    %v95 = vunpack.c.l.b16 %v59
    %v96 = vunpack.c.l.b16 %v60
    %v97 = vpack.c.b16 %v82, %v81
    %v98 = vpack.c.b16 %v84, %v83
    %v99 = vpack.c.b16 %v86, %v85
    %v100 = vpack.c.b16 %v88, %v87
    %v101 = vpack.c.b16 %v90, %v89
    %v102 = vpack.c.b16 %v92, %v91
    %v103 = vpack.c.b16 %v94, %v93
    %v104 = vpack.c.b16 %v96, %v95
    %113 = vmatpush.bf16.msra.mxu0 %v104
    %114 = vmatpush.bf16.msra.mxu0 %v103
    %115 = vmatpush.bf16.msra.mxu0 %v102
    %116 = vmatpush.bf16.msra.mxu0 %v101
    %117 = vmatpush.bf16.msra.mxu0 %v100
    %118 = vmatpush.bf16.msra.mxu0 %v99
    %119 = vmatpush.bf16.msra.mxu0 %v98
    %120 = vmatpush.bf16.msra.mxu0 %v97
    %121 = vmatmul.bf16.gmra.mxu0 %v44
    %v122 = vpop.f32.mrf.mxu0
    %v123 = vadd.f32 %v63, %v122
    %v124 = vpop.f32.mrf.mxu0
    %125 = vdwg.mxu0
    %v126 = vmax.f32 %v123, 0.0
    %v127 = vpack.c.bf16 %v126, %v126
    %v128 = vld [vmem:[%s5] sm:$0xf]
    %v129 = vld [vmem:[%s5 + $0x4] sm:$0xf]
    %v130 = vld [vmem:[%s5 + $0x8] sm:$0xf]
    %v131 = vld [vmem:[%s5 + $0xc] sm:$0xf]
    %v132 = vld [vmem:[%s5 + $0x10] sm:$0xf]
    %v133 = vld [vmem:[%s5 + $0x14] sm:$0xf]
    %v134 = vld [vmem:[%s5 + $0x18] sm:$0xf]
    %v135 = vld [vmem:[%s5 + $0x1c] sm:$0xf]
    %v136 = vld [vmem:[%s5 + $0x20] sm:$0xf]
    %v137 = vld [vmem:[%s5 + $0x24] sm:$0xf]
    %v138 = vld [vmem:[%s5 + $0x28] sm:$0xf]
    %v139 = vld [vmem:[%s5 + $0x2c] sm:$0xf]
    %v140 = vld [vmem:[%s5 + $0x30] sm:$0xf]
    %v141 = vld [vmem:[%s5 + $0x34] sm:$0xf]
    %v142 = vld [vmem:[%s5 + $0x38] sm:$0xf]
    %v143 = vld [vmem:[%s5 + $0x3c] sm:$0xf]
    %v144 = vld [vmem:[%s6] sm:$0x1]
    %v146 = vperm.slane %v144, 0
    %v164 = vunpack.c.l.b16 %v128
    %v165 = vunpack.c.l.b16 %v129
    %v166 = vunpack.c.l.b16 %v130
    %v167 = vunpack.c.l.b16 %v131
    %v168 = vunpack.c.l.b16 %v132
    %v169 = vunpack.c.l.b16 %v133
    %v170 = vunpack.c.l.b16 %v134
    %v171 = vunpack.c.l.b16 %v135
    %v172 = vunpack.c.l.b16 %v136
    %v173 = vunpack.c.l.b16 %v137
    %v174 = vunpack.c.l.b16 %v138
    %v175 = vunpack.c.l.b16 %v139
    %v176 = vunpack.c.l.b16 %v140
    %v177 = vunpack.c.l.b16 %v141
    %v178 = vunpack.c.l.b16 %v142
    %v179 = vunpack.c.l.b16 %v143
    %v180 = vpack.c.b16 %v165, %v164
    %v181 = vpack.c.b16 %v167, %v166
    %v182 = vpack.c.b16 %v169, %v168
    %v183 = vpack.c.b16 %v171, %v170
    %v184 = vpack.c.b16 %v173, %v172
    %v185 = vpack.c.b16 %v175, %v174
    %v186 = vpack.c.b16 %v177, %v176
    %v187 = vpack.c.b16 %v179, %v178
    %196 = vmatpush.bf16.msra.mxu0 %v187
    %197 = vmatpush.bf16.msra.mxu0 %v186
    %198 = vmatpush.bf16.msra.mxu0 %v185
    %199 = vmatpush.bf16.msra.mxu0 %v184
    %200 = vmatpush.bf16.msra.mxu0 %v183
    %201 = vmatpush.bf16.msra.mxu0 %v182
    %202 = vmatpush.bf16.msra.mxu0 %v181
    %203 = vmatpush.bf16.msra.mxu0 %v180
    %204 = vmatmul.bf16.gmra.mxu0 %v127
    %v205 = vpop.f32.mrf.mxu0
    %v206 = vadd.f32 %v146, %v205
    %v207 = vpop.f32.mrf.mxu0
    %208 = vdwg.mxu0
    %v209 = vmax.f32 %v206, 0.0
    %v210 = vpack.c.bf16 %v209, %v209
    %v211 = vld [vmem:[%s7] sm:$0xf]
    %v212 = vld [vmem:[%s7 + $0x4] sm:$0xf]
    %v213 = vld [vmem:[%s7 + $0x8] sm:$0xf]
    %v214 = vld [vmem:[%s7 + $0xc] sm:$0xf]
    %v215 = vld [vmem:[%s7 + $0x10] sm:$0xf]
    %v216 = vld [vmem:[%s7 + $0x14] sm:$0xf]
    %v217 = vld [vmem:[%s7 + $0x18] sm:$0xf]
    %v218 = vld [vmem:[%s7 + $0x1c] sm:$0xf]
    %v219 = vld [vmem:[%s7 + $0x20] sm:$0xf]
    %v220 = vld [vmem:[%s7 + $0x24] sm:$0xf]
    %v221 = vld [vmem:[%s7 + $0x28] sm:$0xf]
    %v222 = vld [vmem:[%s7 + $0x2c] sm:$0xf]
    %v223 = vld [vmem:[%s7 + $0x30] sm:$0xf]
    %v224 = vld [vmem:[%s7 + $0x34] sm:$0xf]
    %v225 = vld [vmem:[%s7 + $0x38] sm:$0xf]
    %v226 = vld [vmem:[%s7 + $0x3c] sm:$0xf]
    %v227 = vld [vmem:[%s8] sm:$0x1]
    %v229 = vperm.slane %v227, 0
    %v247 = vunpack.c.l.b16 %v211
    %v248 = vunpack.c.l.b16 %v212
    %v249 = vunpack.c.l.b16 %v213
    %v250 = vunpack.c.l.b16 %v214
    %v251 = vunpack.c.l.b16 %v215
    %v252 = vunpack.c.l.b16 %v216
    %v253 = vunpack.c.l.b16 %v217
    %v254 = vunpack.c.l.b16 %v218
    %v255 = vunpack.c.l.b16 %v219
    %v256 = vunpack.c.l.b16 %v220
    %v257 = vunpack.c.l.b16 %v221
    %v258 = vunpack.c.l.b16 %v222
    %v259 = vunpack.c.l.b16 %v223
    %v260 = vunpack.c.l.b16 %v224
    %v261 = vunpack.c.l.b16 %v225
    %v262 = vunpack.c.l.b16 %v226
    %v263 = vpack.c.b16 %v248, %v247
    %v264 = vpack.c.b16 %v250, %v249
    %v265 = vpack.c.b16 %v252, %v251
    %v266 = vpack.c.b16 %v254, %v253
    %v267 = vpack.c.b16 %v256, %v255
    %v268 = vpack.c.b16 %v258, %v257
    %v269 = vpack.c.b16 %v260, %v259
    %v270 = vpack.c.b16 %v262, %v261
    %279 = vmatpush.bf16.msra.mxu0 %v270
    %280 = vmatpush.bf16.msra.mxu0 %v269
    %281 = vmatpush.bf16.msra.mxu0 %v268
    %282 = vmatpush.bf16.msra.mxu0 %v267
    %283 = vmatpush.bf16.msra.mxu0 %v266
    %284 = vmatpush.bf16.msra.mxu0 %v265
    %285 = vmatpush.bf16.msra.mxu0 %v264
    %286 = vmatpush.bf16.msra.mxu0 %v263
    %287 = vmatmul.bf16.gmra.mxu0 %v210
    %v288 = vpop.f32.mrf.mxu0
    %v289 = vadd.f32 %v229, %v288
    %v290 = vpop.f32.mrf.mxu0
    %291 = vdwg.mxu0
    %v292 = vmax.f32 %v289, 0.0
    %v293 = vld [vmem:[%s9] sm:$0xff]
    %v294 = vld [vmem:[%s9 + $0x8] sm:$0xff]
    %v295 = vld [vmem:[%s9 + $0x10] sm:$0xff]
    %v296 = vld [vmem:[%s9 + $0x18] sm:$0xff]
    %v297 = vld [vmem:[%s9 + $0x20] sm:$0xff]
    %v298 = vld [vmem:[%s9 + $0x28] sm:$0xff]
    %v299 = vld [vmem:[%s9 + $0x30] sm:$0xff]
    %v300 = vld [vmem:[%s9 + $0x38] sm:$0xff]
    %v301 = vld [vmem:[%s9 + $0x40] sm:$0xff]
    %v302 = vld [vmem:[%s9 + $0x48] sm:$0xff]
    %v303 = vld [vmem:[%s9 + $0x50] sm:$0xff]
    %v304 = vld [vmem:[%s9 + $0x58] sm:$0xff]
    %v305 = vld [vmem:[%s9 + $0x60] sm:$0xff]
    %v306 = vld [vmem:[%s9 + $0x68] sm:$0xff]
    %v307 = vld [vmem:[%s9 + $0x70] sm:$0xff]
    %v308 = vld [vmem:[%s9 + $0x78] sm:$0xff]
    %v309 = vld [vmem:[%s9 + $0x80] sm:$0xff]
    %v310 = vld [vmem:[%s9 + $0x88] sm:$0xff]
    %v311 = vld [vmem:[%s9 + $0x90] sm:$0xff]
    %v312 = vld [vmem:[%s9 + $0x98] sm:$0xff]
    %v313 = vld [vmem:[%s9 + $0xa0] sm:$0xff]
    %v314 = vld [vmem:[%s9 + $0xa8] sm:$0xff]
    %v315 = vld [vmem:[%s9 + $0xb0] sm:$0xff]
    %v316 = vld [vmem:[%s9 + $0xb8] sm:$0xff]
    %v317 = vld [vmem:[%s9 + $0xc0] sm:$0xff]
    %v318 = vld [vmem:[%s9 + $0xc8] sm:$0xff]
    %v319 = vld [vmem:[%s9 + $0xd0] sm:$0xff]
    %v320 = vld [vmem:[%s9 + $0xd8] sm:$0xff]
    %v321 = vld [vmem:[%s9 + $0xe0] sm:$0xff]
    %v322 = vld [vmem:[%s9 + $0xe8] sm:$0xff]
    %v323 = vld [vmem:[%s9 + $0xf0] sm:$0xff]
    %v324 = vld [vmem:[%s9 + $0xf8] sm:$0xff]
    %v325 = vld [vmem:[%s10] sm:$0x3]
    %v327 = vperm.slane %v325, 0
    %v328 = vperm.slane %v325, 1
    %331 = vmatpush.msra.mxu0 %v323
    %332 = vmatpush.msra.mxu0 %v321
    %333 = vmatpush.msra.mxu0 %v319
    %334 = vmatpush.msra.mxu0 %v317
    %335 = vmatpush.msra.mxu0 %v315
    %336 = vmatpush.msra.mxu0 %v313
    %337 = vmatpush.msra.mxu0 %v311
    %338 = vmatpush.msra.mxu0 %v309
    %339 = vmatpush.msra.mxu0 %v307
    %340 = vmatpush.msra.mxu0 %v305
    %341 = vmatpush.msra.mxu0 %v303
    %342 = vmatpush.msra.mxu0 %v301
    %343 = vmatpush.msra.mxu0 %v299
    %344 = vmatpush.msra.mxu0 %v297
    %345 = vmatpush.msra.mxu0 %v295
    %346 = vmatpush.msra.mxu0 %v293
    %347 = vmatmul.f32.gmra.mxu0 %v292
    %v348 = vpop.f32.mrf.mxu0
    %v349 = vadd.f32 %v327, %v348
    %350 = vdwg.mxu0
    %351 = vmatpush.msra.mxu0 %v324
    %352 = vmatpush.msra.mxu0 %v322
    %353 = vmatpush.msra.mxu0 %v320
    %354 = vmatpush.msra.mxu0 %v318
    %355 = vmatpush.msra.mxu0 %v316
    %356 = vmatpush.msra.mxu0 %v314
    %357 = vmatpush.msra.mxu0 %v312
    %358 = vmatpush.msra.mxu0 %v310
    %359 = vmatpush.msra.mxu0 %v308
    %360 = vmatpush.msra.mxu0 %v306
    %361 = vmatpush.msra.mxu0 %v304
    %362 = vmatpush.msra.mxu0 %v302
    %363 = vmatpush.msra.mxu0 %v300
    %364 = vmatpush.msra.mxu0 %v298
    %365 = vmatpush.msra.mxu0 %v296
    %366 = vmatpush.msra.mxu0 %v294
    %367 = vmatmul.f32.gmra.mxu0 %v292
    %v368 = vpop.f32.mrf.mxu0
    %v369 = vadd.f32 %v328, %v368
    %370 = vdwg.mxu0
    %v371 = vmax.f32 %v369, -11.512925
    %v372 = vmin.f32 %v371, 1.609438
    %v373 = vmul.f32 %v372, 1.442695
    %v374 = vpow.pop %v373
    %v375 = vld [vmem:[%s1] sm:$0xff]
    %v376 = vmul.f32 %v374, %v375
    %v377 = vadd.f32 %v349, %v376
    %v378 = vtanh.pop %v377
    %v379 = vtanh.pop %v349
    %v380 = vld [vmem:[%s2] sm:$0x1]
    %v381 = vmul.f32 %v375, %v375
    %v382 = vmul.f32 %v381, -0.5
    %v383 = vmul.f32 %v378, %v378
    %v384 = vsub.f32 1.0, %v383
    %v385 = vadd.f32 %v384, 1e-06
    %v386 = vlog2.pop %v385
    %v387 = vmul.f32 %v386, 0.6931472
    %v388 = vadd.f32 %v372, %v387
    %v390 = vperm.slane %v380, 0
    %v392 = vmul.f32 %v388, %v390
    %v393 = vsub.f32 %v382, %v392
    %394 = vadd.xlane.f32.xlu0 %v393
    %v395 = vpop.xlane.xlu0 %394
    %v396 = vsub.f32 %v395, 7.351508
    %397 = vst [vmem:[#allocation2] sm:$0xff] %v378
    %398 = vst [vmem:[#allocation4] sm:$0xff] %v379
    %399 = vst [vmem:[%s12] sm:$0xff] %v396
    // Predicated region
    $region46: #{actor_forward.1} parent=1 // pred_check
      _
    $region47: #{actor_forward.1} parent=1 // pred_check_branch
      %401 = sbr.rel (0) target = $region49
    $region48: #{actor_forward.1} parent=1 // pred_region
      %403 = vsyncadd [#allocation3], 0
      %s405 = sshll.u32 [#allocation2], 4
      %s406 = int_to_ptr.vmem [resolvable:$true] %s405
      %s407 = sshll.u32 %s11, 4
      %s408 = int_to_ptr.hbm [resolvable:$true] %s407
      %410 = dma.vmem_to_hbm [thread:$0]  %s406, 128, %s408, [#allocation3]
    $region49: #{actor_forward.1} parent=1 // pred_fallthru
      _
    // Predicated region
    $region50: #{actor_forward.1} parent=1 // pred_check
      _
    $region51: #{actor_forward.1} parent=1 // pred_check_branch
      %412 = sbr.rel (0) target = $region53
    $region52: #{actor_forward.1} parent=1 // pred_region
      _
    $region53: #{actor_forward.1} parent=1 // pred_fallthru
      _
    // Predicated region
    $region54: #{actor_forward.1} parent=1 // pred_check
      _
    $region55: #{actor_forward.1} parent=1 // pred_check_branch
      %414 = sbr.rel (0) target = $region57
    $region56: #{actor_forward.1} parent=1 // pred_region
      %416 = vsyncadd [#allocation5], 0
      %s418 = sshll.u32 [#allocation4], 4
      %s419 = int_to_ptr.vmem [resolvable:$true] %s418
      %s420 = sshll.u32 %s13, 4
      %s421 = int_to_ptr.hbm [resolvable:$true] %s420
      %423 = dma.vmem_to_hbm [thread:$0]  %s419, 128, %s421, [#allocation5]
    $region57: #{actor_forward.1} parent=1 // pred_fallthru
      _
    // Predicated region
    $region58: #{actor_forward.1} parent=1 // pred_check
      _
    $region59: #{actor_forward.1} parent=1 // pred_check_branch
      %425 = sbr.rel (0) target = $region61
    $region60: #{actor_forward.1} parent=1 // pred_region
      %427 = dma.done [#allocation3], 128
    $region61: #{actor_forward.1} parent=1 // pred_fallthru
      _
    // Predicated region
    $region62: #{actor_forward.1} parent=1 // pred_check
      _
    $region63: #{actor_forward.1} parent=1 // pred_check_branch
      %429 = sbr.rel (0) target = $region65
    $region64: #{actor_forward.1} parent=1 // pred_region
      _
    $region65: #{actor_forward.1} parent=1 // pred_fallthru
      _
    // Predicated region
    $region66: #{actor_forward.1} parent=1 // pred_check
      _
    $region67: #{actor_forward.1} parent=1 // pred_check_branch
      %431 = sbr.rel (0) target = $region69
    $region68: #{actor_forward.1} parent=1 // pred_region
      %433 = dma.done [#allocation5], 128
    $region69: #{actor_forward.1} parent=1 // pred_fallthru
      _
    %434 = vsyncpa [#allocation3], 1
    %435 = vsyncpa [#allocation5], 1

</llo_original>
